<compile_context>
chip_gen: v7x
topology: tpu7x:2x2x1
jax: 0.10.0
libtpu: 0.0.40
codegen_flags: <defaults>
</compile_context>

<pallas_src>
import functools

import jax
import jax.numpy as jnp
from jax.experimental import pallas as pl
from jax.experimental.pallas import tpu as pltpu

EPS = 1e-5                       # torch BatchNorm2d default eps
_ACT_DTYPE = jnp.bfloat16        # storage dtype for inter-layer activations
_VMEM_LIMIT = 48 * 1024 * 1024   # safe on v7x (64 MiB / TC); big tiles on v5e/v6e


def _cparams(grid_rank):
    return pltpu.CompilerParams(
        dimension_semantics=("parallel",) * grid_rank,
        vmem_limit_bytes=_VMEM_LIMIT,
    )


def _point_tile(total_points, k):
    """Largest point tile (multiple of 128) dividing B*N, with k*P bounded so
    the largest mid-layer f32 temporaries stay comfortably inside VMEM."""
    cands = [p for p in (1024, 512, 256, 128) if total_points % p == 0]
    if not cands:
        # TODO(synk): pad B*N up to a multiple of 128 and mask the tail
        # instead of falling back to a single full-width (masked-store) tile.
        return total_points
    for p in cands:
        if k * p <= 16384:
            return p
    return cands[-1]


def _n_tile(n):
    for p in (1024, 512, 256, 128):
        if n % p == 0:
            return p
    return n


def _tree_reduce(op, parts):
    parts = list(parts)
    while len(parts) > 1:
        nxt = [op(parts[i], parts[i + 1]) for i in range(0, len(parts) - 1, 2)]
        if len(parts) % 2:
            nxt.append(parts[-1])
        parts = nxt
    return parts[0]


def _max_over_k(act, k, p):
    """Balanced tree of maxima over the k lane-aligned (C, p) column blocks."""
    return _tree_reduce(jnp.maximum, [act[:, j * p:(j + 1) * p] for j in range(k)])


# ---------------------------------------------------------------------------
# Kernel 1: pairwise (negative squared) distances, row-tiled
# ---------------------------------------------------------------------------
def _pdist_kernel(xq_ref, xk_ref, o_ref):
    # xq: (1, D, R) query rows (as columns of x), xk: (1, D, N), o: (1, R, N)
    xq = xq_ref[0]                                            # (D, R)
    xk = xk_ref[0]                                            # (D, N)
    inner = jax.lax.dot_general(                              # contract D, no relayout
        xq, xk, (((0,), (0,)), ((), ())),
        preferred_element_type=jnp.float32)                   # (R, N)
    xx_k = jnp.sum(xk * xk, axis=0, keepdims=True)            # (1, N)
    xx_q = jnp.sum(xq * xq, axis=0, keepdims=True)            # (1, R)
    o_ref[0] = 2.0 * inner - xx_k - xx_q.T


def _row_tile(n):
    for r in (1024, 512, 256, 128):
        if n % r == 0 and r * n * 4 <= (8 << 20):
            return r
    return 128 if n % 128 == 0 else n


def pairwise_distance(x):
    # x: (B, D, N) f32  ->  (B, N, N) negative squared pairwise distances
    B, D, N = x.shape
    R = _row_tile(N)
    return pl.pallas_call(
        _pdist_kernel,
        grid=(B, N // R),
        in_specs=[pl.BlockSpec((1, D, R), lambda b, j: (b, 0, j)),
                  pl.BlockSpec((1, D, N), lambda b, j: (b, 0, 0))],
        out_specs=pl.BlockSpec((1, R, N), lambda b, j: (b, j, 0)),
        out_shape=jax.ShapeDtypeStruct((B, N, N), jnp.float32),
        compiler_params=_cparams(2),
    )(x, x)


def knn_indices(x, k):
    # TODO(synk): top-k selection has no clean Pallas equivalent; use lax.top_k.
    return jax.lax.top_k(pairwise_distance(x), k)[1]


# ---------------------------------------------------------------------------
# Kernel 2: conv1 split into neighbour / centre halves + centered BN partials
# ---------------------------------------------------------------------------
def _conv1_kernel(neigh_ref, cent_ref, wn_ref, wc_ref, y_ref, stats_ref, *, k, p):
    # neigh: (D, k*p) bf16, centre: (D, p) bf16, weights: (C1, D) bf16
    a = jnp.dot(wn_ref[...], neigh_ref[...], preferred_element_type=jnp.float32)
    c = jnp.dot(wc_ref[...], cent_ref[...], preferred_element_type=jnp.float32)
    a_blocks = [a[:, j * p:(j + 1) * p] for j in range(k)]
    for j in range(k):                                        # static unroll
        y_ref[:, j * p:(j + 1) * p] = (a_blocks[j] + c).astype(y_ref.dtype)

    # per-tile centered BN partials (no serial per-j accumulator chain):
    #   y_j = a_j + c  ->  sum = sum(a) + k*sum(c)
    #   m2  = sum(a^2) + 2*sum(a_sum * (c-mean)) + k*sum((c-mean)^2)
    cols = k * p
    a_sum = _tree_reduce(lambda u, v: u + v, a_blocks)        # (C1, p)
    s = (jnp.sum(a, axis=1, keepdims=True)
         + float(k) * jnp.sum(c, axis=1, keepdims=True))      # (C1, 1)
    mean = s * (1.0 / cols)
    cm = c - mean
    m2 = (jnp.sum(a * a, axis=1, keepdims=True)
          + 2.0 * jnp.sum(a_sum * cm, axis=1, keepdims=True)
          + float(k) * jnp.sum(cm * cm, axis=1, keepdims=True))
    stats_ref[0] = jnp.concatenate([s, m2], axis=1)           # (C1, 2)


# ---------------------------------------------------------------------------
# Kernel 3: fused BN(prev)+ReLU -> max-over-k -> conv(next) + centered partials
# ---------------------------------------------------------------------------
def _mid_kernel(yprev_ref, scale_ref, shift_ref, w_ref,
                x_ref, ynext_ref, stats_ref, *, k, p):
    yp = yprev_ref[...].astype(jnp.float32)                        # (Cp, k*p)
    act = jnp.maximum(yp * scale_ref[...] + shift_ref[...], 0.0)   # fused BN affine
    x_ref[...] = _max_over_k(act, k, p).astype(x_ref.dtype)        # (Cp, p)
    y = jnp.dot(w_ref[...], act.astype(jnp.bfloat16),
                preferred_element_type=jnp.float32)                # (Cn, k*p)
    ynext_ref[...] = y.astype(ynext_ref.dtype)
    s = jnp.sum(y, axis=1, keepdims=True)
    mean = s * (1.0 / (k * p))
    d = y - mean
    m2 = jnp.sum(d * d, axis=1, keepdims=True)
    stats_ref[0] = jnp.concatenate([s, m2], axis=1)                # (Cn, 2)


# ---------------------------------------------------------------------------
# Kernel 4: BN4+ReLU -> max-over-k -> single K=256 conv5 dot + centered partials
# ---------------------------------------------------------------------------
def _conv5_kernel(y4_ref, scale_ref, shift_ref, x123_ref, w_ref,
                  y5_ref, stats_ref, *, k, p):
    y4 = y4_ref[...].astype(jnp.float32)
    act4 = jnp.maximum(y4 * scale_ref[...] + shift_ref[...], 0.0)
    x4 = _max_over_k(act4, k, p).astype(jnp.bfloat16)              # (C4, p)
    xcat = jnp.concatenate([x123_ref[...], x4], axis=0)            # (256, p) bf16
    y5 = jnp.dot(w_ref[...], xcat, preferred_element_type=jnp.float32)   # (emb, p)
    y5_ref[...] = y5.astype(y5_ref.dtype)
    s = jnp.sum(y5, axis=1, keepdims=True)
    mean = s * (1.0 / p)
    d = y5 - mean
    m2 = jnp.sum(d * d, axis=1, keepdims=True)
    stats_ref[0] = jnp.concatenate([s, m2], axis=1)                # (emb, 2)


# ---------------------------------------------------------------------------
# Kernel 5: final BN + ReLU, written directly in (B, emb, N) layout
# ---------------------------------------------------------------------------
def _bn_relu_kernel(y_ref, scale_ref, shift_ref, o_ref):
    y = y_ref[...].astype(jnp.float32)
    o_ref[0] = jnp.maximum(y * scale_ref[...] + shift_ref[...], 0.0)


# ---------------------------------------------------------------------------
# host-side glue
# ---------------------------------------------------------------------------
def _bn_affine(stats, tile_count, gamma, beta):
    """Fold train-mode BatchNorm (biased var, eps=1e-5) into one affine.

    stats: (T, C, 2) per-tile (sum, centered sum of squares); combined with
    Chan's parallel-variance rule (avoids E[x^2]-E[x]^2 cancellation).
    Note: stats come from the f32 pre-cast y; the y later normalised is the
    bf16-stored copy (mismatch is tiny and covered by test tolerances)."""
    s = stats[:, :, 0]                                 # (T, C)
    m2 = stats[:, :, 1]                                # (T, C)
    t = stats.shape[0]
    total = t * tile_count
    mean = jnp.sum(s, axis=0) / total
    tile_mean = s / tile_count
    big_m2 = jnp.sum(m2, axis=0) + tile_count * jnp.sum(
        (tile_mean - mean[None, :]) ** 2, axis=0)
    var = jnp.maximum(big_m2 / total, 0.0)
    scale = gamma * jax.lax.rsqrt(var + EPS)
    shift = beta - mean * scale
    return (scale[:, None].astype(jnp.float32),
            shift[:, None].astype(jnp.float32))


def _mid_layer_call(y_prev, scale, shift, w_t, k, p, g_pts):
    cp_, cn = y_prev.shape[0], w_t.shape[0]
    t = g_pts // p
    return pl.pallas_call(
        functools.partial(_mid_kernel, k=k, p=p),
        grid=(t,),
        in_specs=[pl.BlockSpec((cp_, k * p), lambda i: (0, i)),
                  pl.BlockSpec((cp_, 1), lambda i: (0, 0)),
                  pl.BlockSpec((cp_, 1), lambda i: (0, 0)),
                  pl.BlockSpec((cn, cp_), lambda i: (0, 0))],
        out_specs=[pl.BlockSpec((cp_, p), lambda i: (0, i)),
                   pl.BlockSpec((cn, k * p), lambda i: (0, i)),
                   pl.BlockSpec((1, cn, 2), lambda i: (i, 0, 0))],
        out_shape=[jax.ShapeDtypeStruct((cp_, g_pts), _ACT_DTYPE),
                   jax.ShapeDtypeStruct((cn, k * g_pts), _ACT_DTYPE),
                   jax.ShapeDtypeStruct((t, cn, 2), jnp.float32)],
        compiler_params=_cparams(1),
    )(y_prev, scale, shift, w_t)


def dgcnn_forward(x, params, k=8, idx=None):
    """x: (B, D, N) f32 (D == 3; conv1 expects 2*D == 6 inputs) -> (B, emb, N)."""
    B, D, N = x.shape
    assert params["w1"].shape[0] == 2 * D
    G = B * N
    P = _point_tile(G, k)
    T = G // P
    bf = jnp.bfloat16

    # ---- knn + graph-feature gather (JAX glue) -----------------------------
    # TODO(synk): top-k and the data-dependent neighbour gather stay in plain
    # JAX (lax.top_k + advanced indexing); no clean Pallas equivalent.
    if idx is None:
        idx = knn_indices(x, k)                              # (B, N, k)
    xt = jnp.transpose(x, (0, 2, 1))                         # (B, N, D)
    neigh = xt[jnp.arange(B)[:, None, None], idx]            # (B, N, k, D)

    # channel-major, lane-dense layouts.  Per-neighbour tensors use
    # (point-tile, neighbour, point) column order so max-over-k is tile-local.
    nb = neigh.reshape(T, P, k, D)
    neigh_cm = jnp.transpose(nb, (3, 0, 2, 1)).reshape(D, T * k * P).astype(bf)
    cent_cm = xt.reshape(G, D).T.astype(bf)                  # (D, G)

    C1 = params["w1"].shape[1]
    C2 = params["w2"].shape[1]
    C3 = params["w3"].shape[1]
    C4 = params["w4"].shape[1]
    emb = params["w5"].shape[1]
    c123 = C1 + C2 + C3

    # transposed bf16 weights (Cout, Cin) for channel-major matmuls
    w1n_t = params["w1"][:D].T.astype(bf)                    # neighbour half
    w1c_t = params["w1"][D:].T.astype(bf)                    # centre half
    w2_t = params["w2"].T.astype(bf)
    w3_t = params["w3"].T.astype(bf)
    w4_t = params["w4"].T.astype(bf)
    w5_t = params["w5"].T.astype(bf)                         # (emb, 256) — one K=256 dot

    # ---- layer 1 ------------------------------------------------------------
    y1, st1 = pl.pallas_call(
        functools.partial(_conv1_kernel, k=k, p=P),
        grid=(T,),
        in_specs=[pl.BlockSpec((D, k * P), lambda i: (0, i)),
                  pl.BlockSpec((D, P), lambda i: (0, i)),
                  pl.BlockSpec((C1, D), lambda i: (0, 0)),
                  pl.BlockSpec((C1, D), lambda i: (0, 0))],
        out_specs=[pl.BlockSpec((C1, k * P), lambda i: (0, i)),
                   pl.BlockSpec((1, C1, 2), lambda i: (i, 0, 0))],
        out_shape=[jax.ShapeDtypeStruct((C1, k * G), _ACT_DTYPE),
                   jax.ShapeDtypeStruct((T, C1, 2), jnp.float32)],
        compiler_params=_cparams(1),
    )(neigh_cm, cent_cm, w1n_t, w1c_t)
    sc1, sh1 = _bn_affine(st1, k * P, params["g1"], params["b1"])

    # ---- layers 2..4 ---------------------------------------------------------
    x1_cm, y2, st2 = _mid_layer_call(y1, sc1, sh1, w2_t, k, P, G)
    sc2, sh2 = _bn_affine(st2, k * P, params["g2"], params["b2"])
    x2_cm, y3, st3 = _mid_layer_call(y2, sc2, sh2, w3_t, k, P, G)
    sc3, sh3 = _bn_affine(st3, k * P, params["g3"], params["b3"])
    x3_cm, y4, st4 = _mid_layer_call(y3, sc3, sh3, w4_t, k, P, G)
    sc4, sh4 = _bn_affine(st4, k * P, params["g4"], params["b4"])

    # pre-concatenate x1..x3 channel-major; x4 is appended inside the kernel
    x123 = jnp.concatenate([x1_cm, x2_cm, x3_cm], axis=0)    # (c123, G) bf16

    # ---- layer 5: one K=256 contraction over cat(x1..x4) ---------------------
    y5, st5 = pl.pallas_call(
        functools.partial(_conv5_kernel, k=k, p=P),
        grid=(T,),
        in_specs=[pl.BlockSpec((C4, k * P), lambda i: (0, i)),
                  pl.BlockSpec((C4, 1), lambda i: (0, 0)),
                  pl.BlockSpec((C4, 1), lambda i: (0, 0)),
                  pl.BlockSpec((c123, P), lambda i: (0, i)),
                  pl.BlockSpec((emb, c123 + C4), lambda i: (0, 0))],
        out_specs=[pl.BlockSpec((emb, P), lambda i: (0, i)),
                   pl.BlockSpec((1, emb, 2), lambda i: (i, 0, 0))],
        out_shape=[jax.ShapeDtypeStruct((emb, G), _ACT_DTYPE),
                   jax.ShapeDtypeStruct((T, emb, 2), jnp.float32)],
        compiler_params=_cparams(1),
    )(y4, sc4, sh4, x123, w5_t)
    sc5, sh5 = _bn_affine(st5, P, params["g5"], params["b5"])

    # ---- final BN + ReLU, output directly in (B, emb, N) ----------------------
    Pn = _n_tile(N)
    npn = N // Pn
    out = pl.pallas_call(
        _bn_relu_kernel,
        grid=(B, npn),
        in_specs=[pl.BlockSpec((emb, Pn), lambda b, j: (0, b * npn + j)),
                  pl.BlockSpec((emb, 1), lambda b, j: (0, 0)),
                  pl.BlockSpec((emb, 1), lambda b, j: (0, 0))],
        out_specs=pl.BlockSpec((1, emb, Pn), lambda b, j: (b, 0, j)),
        out_shape=jax.ShapeDtypeStruct((B, emb, N), jnp.float32),
        compiler_params=_cparams(2),
    )(y5, sc5, sh5)
    return out


# ---------------------------------------------------------------------------
# deterministic parameter init (torch layer shapes; conv weight (Cout, Cin, 1, 1)
# stored transposed as (Cin, Cout) matrices, BN gamma/beta as (C,) vectors)
# ---------------------------------------------------------------------------
def init_params(key, emb_dims=64):
    ks = jax.random.split(key, 15)

    def w(kk, cin, cout):
        return 0.1 * jax.random.normal(kk, (cin, cout), jnp.float32)

    def g(kk, c):
        return 1.0 + 0.1 * jax.random.normal(kk, (c,), jnp.float32)

    def b(kk, c):
        return 0.1 * jax.random.normal(kk, (c,), jnp.float32)

    chans = [(6, 32), (32, 32), (32, 64), (64, 128), (256, emb_dims)]
    params = {}
    for i, (cin, cout) in enumerate(chans, start=1):
        params[f"w{i}"] = w(ks[3 * (i - 1) + 0], cin, cout)
        params[f"g{i}"] = g(ks[3 * (i - 1) + 1], cout)
        params[f"b{i}"] = b(ks[3 * (i - 1) + 2], cout)
    return params


# ---------------------------------------------------------------------------
# pure-JAX f32 references (same math as the torch module) for sanity checks
# ---------------------------------------------------------------------------
def reference_pairwise_distance(x):
    xt = jnp.transpose(x, (0, 2, 1))
    xx = jnp.sum(xt * xt, axis=-1, keepdims=True)
    inner = jnp.einsum("bnd,bmd->bnm", xt, xt,
                       precision=jax.lax.Precision.HIGHEST)
    return 2.0 * inner - xx - jnp.transpose(xx, (0, 2, 1))


def reference_forward(x, params, k=8, idx=None):
    B, D, N = x.shape
    xt = jnp.transpose(x, (0, 2, 1))
    if idx is None:
        idx = jax.lax.top_k(reference_pairwise_distance(x), k)[1]
    neigh = xt[jnp.arange(B)[:, None, None], idx]
    center = jnp.broadcast_to(xt[:, :, None, :], (B, N, k, D))
    feat = jnp.concatenate([neigh, center], axis=-1)         # (B, N, k, 2D)
    h = jnp.transpose(feat, (0, 3, 1, 2))                    # (B, 2D, N, k)

    def cbr(h, w, g, b):
        y = jnp.einsum("bchw,cd->bdhw", h, w,
                       precision=jax.lax.Precision.HIGHEST)
        mean = jnp.mean(y, axis=(0, 2, 3), keepdims=True)
        var = jnp.mean((y - mean) ** 2, axis=(0, 2, 3), keepdims=True)
        yh = (y - mean) * jax.lax.rsqrt(var + EPS)
        return jnp.maximum(yh * g.reshape(1, -1, 1, 1) + b.reshape(1, -1, 1, 1), 0.0)

    h1 = cbr(h, params["w1"], params["g1"], params["b1"]); x1 = jnp.max(h1, -1, keepdims=True)
    h2 = cbr(h1, params["w2"], params["g2"], params["b2"]); x2 = jnp.max(h2, -1, keepdims=True)
    h3 = cbr(h2, params["w3"], params["g3"], params["b3"]); x3 = jnp.max(h3, -1, keepdims=True)
    h4 = cbr(h3, params["w4"], params["g4"], params["b4"]); x4 = jnp.max(h4, -1, keepdims=True)
    cat = jnp.concatenate([x1, x2, x3, x4], axis=1)           # (B, 256, N, 1)
    out = cbr(cat, params["w5"], params["g5"], params["b5"])  # (B, emb, N, 1)
    return out[..., 0]


if __name__ == "__main__":
    key = jax.random.PRNGKey(0)
    kx, kp = jax.random.split(key)
    B, D, N, K, EMB = 2, 3, 256, 8, 64
    x = jax.random.normal(kx, (B, D, N), jnp.float32)
    params = init_params(kp, emb_dims=EMB)

    # distance kernel check (row-tiled Pallas vs high-precision XLA reference)
    pd = jax.block_until_ready(pairwise_distance(x))
    pd_ref = reference_pairwise_distance(x)
    pd_err = float(jnp.max(jnp.abs(pd - pd_ref)))
    assert pd_err < 1e-2 * (float(jnp.max(jnp.abs(pd_ref))) + 1.0), pd_err

    # share k-NN indices between the Pallas path and the reference so the
    # check is not sensitive to fp-dependent tie-breaking inside top_k
    idx = jax.lax.top_k(pd, K)[1]

    out = jax.block_until_ready(dgcnn_forward(x, params, k=K, idx=idx))
    assert out.shape == (B, EMB, N), out.shape

    ref = jax.block_until_ready(reference_forward(x, params, k=K, idx=idx))
    # bf16 MXU inputs + bf16 inter-layer storage -> compare with a relative
    # (Frobenius) metric plus a loose elementwise bound.
    rel = float(jnp.linalg.norm(out - ref) / (jnp.linalg.norm(ref) + 1e-12))
    mx = float(jnp.max(jnp.abs(out - ref)))
    assert rel < 5e-2 and mx < 0.3, (rel, mx)

    print("KERNEL_OK")
</pallas_src>

<mosaic_0001>
module attributes {stable_mosaic.version = 11 : i64} {
  func.func @_pdist_kernel(%arg0: i32, %arg1: i32, %arg2: memref<1x3x256xf32, #tpu.memory_space<vmem>>, %arg3: memref<1x3x256xf32, #tpu.memory_space<vmem>>, %arg4: memref<1x256x256xf32, #tpu.memory_space<vmem>>) attributes {dimension_semantics = [#tpu.dimension_semantics<parallel>, #tpu.dimension_semantics<parallel>], iteration_bounds = array<i64: 2, 1>, scalar_prefetch = 0 : i64, scratch_operands = 0 : i64, tpu.core_type = #tpu.core_type<tc>, window_params = [{transform_indices = @transform_0, window_bounds = array<i64: 1, 3, 256>}, {transform_indices = @transform_1, window_bounds = array<i64: 1, 3, 256>}, {transform_indices = @transform_2, window_bounds = array<i64: 1, 256, 256>}]} {
    %c0 = arith.constant 0 : index
    %c0_0 = arith.constant 0 : index
    %c0_1 = arith.constant 0 : index
    %0 = vector.load %arg2[%c0, %c0_0, %c0_1] : memref<1x3x256xf32, #tpu.memory_space<vmem>>, vector<1x3x256xf32>
    %1 = vector.shape_cast %0 : vector<1x3x256xf32> to vector<3x256xf32>
    %c0_2 = arith.constant 0 : index
    %c0_3 = arith.constant 0 : index
    %c0_4 = arith.constant 0 : index
    %2 = vector.load %arg3[%c0_2, %c0_3, %c0_4] : memref<1x3x256xf32, #tpu.memory_space<vmem>>, vector<1x3x256xf32>
    %3 = vector.shape_cast %2 : vector<1x3x256xf32> to vector<3x256xf32>
    %cst = arith.constant dense<0.000000e+00> : vector<256x256xf32>
    %4 = tpu.matmul %1, %3, %cst {dimension_numbers = #tpu.dot_dimension_numbers<[0], [0], [1], [1], [0, 1, 1, 1], [], []>} : vector<3x256xf32>, vector<3x256xf32>, vector<256x256xf32> -> vector<256x256xf32>
    %5 = arith.mulf %3, %3 : vector<3x256xf32>
    %cst_5 = arith.constant dense<0.000000e+00> : vector<256xf32>
    %6 = vector.multi_reduction <add>, %5, %cst_5 [0] : vector<3x256xf32> to vector<256xf32>
    %7 = vector.shape_cast %6 : vector<256xf32> to vector<1x256xf32>
    %8 = arith.mulf %1, %1 : vector<3x256xf32>
    %cst_6 = arith.constant dense<0.000000e+00> : vector<256xf32>
    %9 = vector.multi_reduction <add>, %8, %cst_6 [0] : vector<3x256xf32> to vector<256xf32>
    %10 = vector.shape_cast %9 : vector<256xf32> to vector<1x256xf32>
    %cst_7 = arith.constant 2.000000e+00 : f32
    %11 = vector.broadcast %cst_7 : f32 to vector<256x256xf32>
    %12 = arith.mulf %11, %4 : vector<256x256xf32>
    %13 = vector.broadcast %7 : vector<1x256xf32> to vector<256x256xf32>
    %14 = arith.subf %12, %13 : vector<256x256xf32>
    %15 = tpu.transpose %10, [1, 0] : vector<1x256xf32> -> vector<256x1xf32>
    %16 = vector.broadcast %15 : vector<256x1xf32> to vector<256x256xf32>
    %17 = arith.subf %14, %16 : vector<256x256xf32>
    %c0_8 = arith.constant 0 : index
    %c0_9 = arith.constant 0 : index
    %c0_10 = arith.constant 0 : index
    %18 = vector.load %arg4[%c0_8, %c0_9, %c0_10] : memref<1x256x256xf32, #tpu.memory_space<vmem>>, vector<1x256x256xf32>
    %19 = vector.shape_cast %18 : vector<1x256x256xf32> to vector<256x256xf32>
    %20 = vector.shape_cast %17 : vector<256x256xf32> to vector<1x256x256xf32>
    tpu.vector_store %arg4[%c0_8, %c0_9, %c0_10], %20 {strides = array<i32>} : memref<1x256x256xf32, #tpu.memory_space<vmem>>, vector<1x256x256xf32>,
    return
  }
  func.func @transform_0(%arg0: i32, %arg1: i32) -> (i32, i32, i32) {
    %c0_i32 = arith.constant 0 : i32
    %c0_i32_0 = arith.constant 0 : i32
    return %arg0, %c0_i32, %arg1 : i32, i32, i32
  }
  func.func @transform_1(%arg0: i32, %arg1: i32) -> (i32, i32, i32) {
    %c0_i32 = arith.constant 0 : i32
    %c0_i32_0 = arith.constant 0 : i32
    %c0_i32_1 = arith.constant 0 : i32
    return %arg0, %c0_i32, %c0_i32_0 : i32, i32, i32
  }
  func.func @transform_2(%arg0: i32, %arg1: i32) -> (i32, i32, i32) {
    %c0_i32 = arith.constant 0 : i32
    %c0_i32_0 = arith.constant 0 : i32
    return %arg0, %arg1, %c0_i32 : i32, i32, i32
  }
}

</mosaic_0001>

<llo_original>
// kernel: tpu_custom_call.1
$region0: #{tpu_custom_call.1}
  #allocation0 [shape = 'u32[]', space=smem, size = 0x4, offset = 0x4, fixed_abs, tag = 'smem constant byte address 0x4 - core index']
  #allocation1 [shape = 'u32[144,128]{1,0:T(1,128)}', space=vmem, size = 0x12000, scoped, tag = 'internal scratch']
  %s0 = inlined_call_operand.vmem [shape: f32[2,3,256], index: 0, kind: input, shape index: {}]
  %s1 = inlined_call_operand.vmem [shape: f32[2,3,256], index: 1, kind: input, shape index: {}]
  %s2 = inlined_call_operand.hbm [shape: f32[2,256,256], index: 2, kind: output, shape index: {}]
  %s3 = sld [smem:[#allocation0]]
  $region41: #{tpu_custom_call.1} parent=0
    _
  %s5 = ssub.s32 1, %s3
  %s6 = scalar_select 0, %s5, %s3
  $region1: #{tpu_custom_call.1} parent=0
    #allocation2 [shape = 'u8[524288]{0}', space=vmem, size = 0x80000, scoped, tag = 'output window, operand 0']
    #allocation3 [shape = 's32[2]{0}', space=sflag, size = 0x8, scoped, tag = 'scoped memory for tpu_custom_call.1']
    %7 = vsyncpa [#allocation3], 0
    %s8 = scalar_lea.sflag [#allocation3], 1
    %9 = vsyncpa %s8, 0
    loop: start=0, step=1, limit=4
    $region2: #{tpu_custom_call.1} parent=1 // loop_pre_header
      _
    $region3: #{tpu_custom_call.1} parent=1 // loop_header
      %s11 = sphi 0, %s15
      %p12 = scmp.ge.s32.totalorder %s11, 4
      %s18 = sphi 0, %s30
      %s19 = sphi 0, %s26
      %s20 = sphi 0, %s18
      %s21 = sphi 0, %s19
      %s22 = sphi 0, %s20
      %s23 = sphi 0, %s21
      %s35 = sphi 0, %s37
      %s38 = sphi 0, %s35
      %s39 = sphi 0, %s38
      %s55 = sphi 0, %s39
      %s61 = sphi 0, %s63
      %s64 = sphi 0, %s61
      %s65 = sphi 0, %s64
      %s81 = sphi 0, %s65
      %s89 = sphi 0, %s91
      %s92 = sphi 0, %s89
      %s93 = sphi 0, %s92
      %s109 = sphi 0, %s93
    $region4: #{tpu_custom_call.1} parent=1 // loop_header_branch
      %14 = sbr.rel (%p12) target = $region8
    $region5: #{tpu_custom_call.1} parent=1 // loop_body
      %s16 = ssub.s32 %s11, 1
      %s17 = ssub.s32 %s11, 2
      %s24 = sadd.s32 1, %s19
      %p25 = scmp.ge.s32.totalorder %s24, 1
      %s26 = scalar_select %p25, 0, %s24
      %s27 = sadd.s32 1, %s18
      %s28 = scalar_select %p25, %s27, %s18
      %p29 = scmp.ge.s32.totalorder %s28, 2
      %s30 = scalar_select %p29, 0, %s28
      %s31 = ssub.s32 %s18, %s30
      %s32 = ssub.s32 %s19, %s26
      %s33 = sor.u32 %s31, %s32
      %p34 = scmp.eq.s32.totalorder %s33, 0
      %s36 = sadd.s32 %s35, 1
      %s37 = scalar_select %p34, %s35, %s36
      %p40 = pneg %p34
      %p41 = scmp.eq.s32.totalorder %s11, 1
      %p42 = por %p40, %p41
      %p43 = scmp.ne.s32.totalorder %s35, %s38
      %p44 = scmp.eq.s32.totalorder %s11, 0
      %p45 = por %p43, %p44
      %p46 = scmp.ne.s32.totalorder %s35, %s38
      %p47 = scmp.eq.s32.totalorder %s16, 1
      %p48 = por %p46, %p47
      %p49 = scmp.ne.s32.totalorder %s38, %s39
      %p50 = scmp.eq.s32.totalorder %s16, 0
      %p51 = por %p49, %p50
      %p52 = scmp.ne.s32.totalorder %s38, %s39
      %p53 = scmp.eq.s32.totalorder %s17, 1
      %p54 = por %p52, %p53
      %p56 = scmp.ne.s32.totalorder %s39, %s55
      %p57 = scmp.eq.s32.totalorder %s17, 0
      %p58 = por %p56, %p57
      %s59 = ssub.s32 %s18, %s30
      %p60 = scmp.eq.s32.totalorder %s59, 0
      %s62 = sadd.s32 %s61, 1
      %s63 = scalar_select %p60, %s61, %s62
      %p66 = pneg %p60
      %p67 = scmp.eq.s32.totalorder %s11, 1
      %p68 = por %p66, %p67
      %p69 = scmp.ne.s32.totalorder %s61, %s64
      %p70 = scmp.eq.s32.totalorder %s11, 0
      %p71 = por %p69, %p70
      %p72 = scmp.ne.s32.totalorder %s61, %s64
      %p73 = scmp.eq.s32.totalorder %s16, 1
      %p74 = por %p72, %p73
      %p75 = scmp.ne.s32.totalorder %s64, %s65
      %p76 = scmp.eq.s32.totalorder %s16, 0
      %p77 = por %p75, %p76
      %p78 = scmp.ne.s32.totalorder %s64, %s65
      %p79 = scmp.eq.s32.totalorder %s17, 1
      %p80 = por %p78, %p79
      %p82 = scmp.ne.s32.totalorder %s65, %s81
      %p83 = scmp.eq.s32.totalorder %s17, 0
      %p84 = por %p82, %p83
      %s85 = ssub.s32 %s18, %s30
      %s86 = ssub.s32 %s19, %s26
      %s87 = sor.u32 %s85, %s86
      %p88 = scmp.eq.s32.totalorder %s87, 0
      %s90 = sadd.s32 %s89, 1
      %s91 = scalar_select %p88, %s89, %s90
      %p94 = pneg %p88
      %p95 = scmp.eq.s32.totalorder %s11, 1
      %p96 = por %p94, %p95
      %p97 = scmp.ne.s32.totalorder %s89, %s92
      %p98 = scmp.eq.s32.totalorder %s11, 0
      %p99 = por %p97, %p98
      %p100 = scmp.ne.s32.totalorder %s89, %s92
      %p101 = scmp.eq.s32.totalorder %s16, 1
      %p102 = por %p100, %p101
      %p103 = scmp.ne.s32.totalorder %s92, %s93
      %p104 = scmp.eq.s32.totalorder %s16, 0
      %p105 = por %p103, %p104
      %p106 = scmp.ne.s32.totalorder %s92, %s93
      %p107 = scmp.eq.s32.totalorder %s17, 1
      %p108 = por %p106, %p107
      %p110 = scmp.ne.s32.totalorder %s93, %s109
      %p111 = scmp.eq.s32.totalorder %s17, 0
      %p112 = por %p110, %p111
      %p113 = scmp.le.s32.totalorder 1, %s11
      %p114 = scmp.lt.s32.totalorder %s11, 3
      %p115 = pnand %p113, %p114
      %p116 = pneg %p115
      // Predicated region
      $region9: #{tpu_custom_call.1} parent=5 // pred_check
        _
      $region10: #{tpu_custom_call.1} parent=5 // pred_check_branch
        %118 = sbr.rel (%p115) target = $region12
      $region11: #{tpu_custom_call.1} parent=5 // pred_region
        %s119 = ssub.s32 %s11, 1
      $region12: #{tpu_custom_call.1} parent=5 // pred_fallthru
        _
      %p120 = scmp.lt.s32.totalorder %s11, 2
      // Predicated region
      $region13: #{tpu_custom_call.1} parent=5 // pred_check
        %p121 = pneg %p120
      $region14: #{tpu_custom_call.1} parent=5 // pred_check_branch
        %123 = sbr.rel (%p121) target = $region16
      $region15: #{tpu_custom_call.1} parent=5 // pred_region
        // Predicated region
        $region17: #{tpu_custom_call.1} parent=15 // pred_check
          %p124 = pneg %p45
        $region18: #{tpu_custom_call.1} parent=15 // pred_check_branch
          %126 = sbr.rel (%p124) target = $region20
        $region19: #{tpu_custom_call.1} parent=15 // pred_region
          %s127 = smul.u32 2, %s19
          %p128 = scmp.lt.s32.totalorder %s18, 1
          %s129 = scalar_select %p128, %s18, 1
          %p130 = scmp.lt.s32.totalorder %s127, 1
          %s131 = scalar_select %p130, %s127, 1
          %s132 = smul.addr %s129, 2
          %s133 = sadd.s32 %s131, %s132
          %s134 = smul.addr %s133, 4
          %s135 = scalar_lea.vmem %s0, %s134
          %s136 = smul.u32 2, %s19
        $region20: #{tpu_custom_call.1} parent=15 // pred_fallthru
          _
        // Predicated region
        $region21: #{tpu_custom_call.1} parent=15 // pred_check
          %p137 = pneg %p71
        $region22: #{tpu_custom_call.1} parent=15 // pred_check_branch
          %139 = sbr.rel (%p137) target = $region24
        $region23: #{tpu_custom_call.1} parent=15 // pred_region
          %p140 = scmp.lt.s32.totalorder %s18, 1
          %s141 = scalar_select %p140, %s18, 1
          %s142 = smul.addr %s141, 2
          %s143 = smul.addr %s142, 4
          %s144 = scalar_lea.vmem %s1, %s143
        $region24: #{tpu_custom_call.1} parent=15 // pred_fallthru
          _
      $region16: #{tpu_custom_call.1} parent=5 // pred_fallthru
        _
      %p145 = scmp.le.s32.totalorder 1, %s11
      %p146 = scmp.lt.s32.totalorder %s11, 3
      %p147 = pnand %p145, %p146
      %p148 = pneg %p147
      // Predicated region
      $region25: #{tpu_custom_call.1} parent=5 // pred_check
        _
      $region26: #{tpu_custom_call.1} parent=5 // pred_check_branch
        %150 = sbr.rel (%p147) target = $region28
      $region27: #{tpu_custom_call.1} parent=5 // pred_region
        %s151 = ssub.s32 %s11, 1
        %s152 = smul.u32 2, %s21
        %p153 = scmp.lt.s32.totalorder %s20, 1
        %s154 = scalar_select %p153, %s20, 1
        %p155 = scmp.lt.s32.totalorder %s152, 1
        %s156 = scalar_select %p155, %s152, 1
        %s157 = smul.addr %s154, 2
        %s158 = sadd.s32 %s156, %s157
        %s159 = smul.addr %s158, 4
        %s160 = scalar_lea.vmem %s0, %s159
        %p161 = pneg %p51
        %p162 = pneg %p48
        %p163 = scmp.lt.s32.totalorder %s20, 1
        %s164 = scalar_select %p163, %s20, 1
        %s165 = smul.addr %s164, 2
        %s166 = smul.addr %s165, 4
        %s167 = scalar_lea.vmem %s1, %s166
        %p168 = pneg %p77
        %p169 = pneg %p74
        %p170 = pneg %p105
        %p171 = pneg %p102
        %s172 = sand.u32 %s92, 1
        %s173 = scalar_lea.sflag [#allocation3], %s172
        %s174 = sand.u32 %s92, 1
        %s175 = smul.addr %s174, 512
        %s176 = scalar_lea.vmem [#allocation2], %s175
        %s177 = smul.u32 2, %s21
        %p178 = scmp.lt.s32.totalorder %s20, 1
        %s179 = scalar_select %p178, %s20, 1
        %p180 = scmp.lt.s32.totalorder %s177, 1
        %s181 = scalar_select %p180, %s177, 1
        %s182 = smul.addr %s179, 2
        %s183 = sadd.s32 %s181, %s182
        %s184 = smul.addr %s183, 4
        %s185 = scalar_lea.vmem %s0, %s184
        %s186 = smul.u32 2, %s21
        %p187 = scmp.lt.s32.totalorder %s20, 1
        %s188 = scalar_select %p187, %s20, 1
        %s189 = smul.addr %s188, 2
        %s190 = smul.addr %s189, 4
        %s191 = scalar_lea.vmem %s1, %s190
        %s192 = smul.u32 32, %s21
        %v193 = vld [vmem:[%s185] sm:$0x77]
        %v194 = vld [vmem:[%s191] sm:$0x77]
        %v196 = vcombine.high %v193, %v193
        %198 = vxpose.xlu0.b32.start [1/16] %v193, 128
        %199 = vxpose.xlu0.b32.cont [2/16] 0.0, 128
        %200 = vxpose.xlu0.b32.cont [3/16] 0.0, 128
        %201 = vxpose.xlu0.b32.cont [4/16] 0.0, 128
        %202 = vxpose.xlu0.b32.cont [5/16] 0.0, 128
        %203 = vxpose.xlu0.b32.cont [6/16] 0.0, 128
        %204 = vxpose.xlu0.b32.cont [7/16] 0.0, 128
        %205 = vxpose.xlu0.b32.cont [8/16] 0.0, 128
        %206 = vxpose.xlu0.b32.cont [9/16] 0.0, 128
        %207 = vxpose.xlu0.b32.cont [10/16] 0.0, 128
        %208 = vxpose.xlu0.b32.cont [11/16] 0.0, 128
        %209 = vxpose.xlu0.b32.cont [12/16] 0.0, 128
        %210 = vxpose.xlu0.b32.cont [13/16] 0.0, 128
        %211 = vxpose.xlu0.b32.cont [14/16] 0.0, 128
        %212 = vxpose.xlu0.b32.cont [15/16] 0.0, 128
        %213 = vxpose.xlu0.b32.end [16/16] 0.0, 128
        %v214 = vpop.trf.xlu0
        %v215 = vpop.trf.xlu0
        %v216 = vpop.trf.xlu0
        %v217 = vpop.trf.xlu0
        %v218 = vpop.trf.xlu0
        %v219 = vpop.trf.xlu0
        %v220 = vpop.trf.xlu0
        %v221 = vpop.trf.xlu0
        %v222 = vpop.trf.xlu0
        %v223 = vpop.trf.xlu0
        %v224 = vpop.trf.xlu0
        %v225 = vpop.trf.xlu0
        %v226 = vpop.trf.xlu0
        %v227 = vpop.trf.xlu0
        %v228 = vpop.trf.xlu0
        %v229 = vpop.trf.xlu0
        %230 = vxpose.xlu0.b32.start [1/16] %v196, 128
        %231 = vxpose.xlu0.b32.cont [2/16] 0.0, 128
        %232 = vxpose.xlu0.b32.cont [3/16] 0.0, 128
        %233 = vxpose.xlu0.b32.cont [4/16] 0.0, 128
        %234 = vxpose.xlu0.b32.cont [5/16] 0.0, 128
        %235 = vxpose.xlu0.b32.cont [6/16] 0.0, 128
        %236 = vxpose.xlu0.b32.cont [7/16] 0.0, 128
        %237 = vxpose.xlu0.b32.cont [8/16] 0.0, 128
        %238 = vxpose.xlu0.b32.cont [9/16] 0.0, 128
        %239 = vxpose.xlu0.b32.cont [10/16] 0.0, 128
        %240 = vxpose.xlu0.b32.cont [11/16] 0.0, 128
        %241 = vxpose.xlu0.b32.cont [12/16] 0.0, 128
        %242 = vxpose.xlu0.b32.cont [13/16] 0.0, 128
        %243 = vxpose.xlu0.b32.cont [14/16] 0.0, 128
        %244 = vxpose.xlu0.b32.cont [15/16] 0.0, 128
        %245 = vxpose.xlu0.b32.end [16/16] 0.0, 128
        %v246 = vpop.trf.xlu0
        %v247 = vpop.trf.xlu0
        %v248 = vpop.trf.xlu0
        %v249 = vpop.trf.xlu0
        %v250 = vpop.trf.xlu0
        %v251 = vpop.trf.xlu0
        %v252 = vpop.trf.xlu0
        %v253 = vpop.trf.xlu0
        %v254 = vpop.trf.xlu0
        %v255 = vpop.trf.xlu0
        %v256 = vpop.trf.xlu0
        %v257 = vpop.trf.xlu0
        %v258 = vpop.trf.xlu0
        %v259 = vpop.trf.xlu0
        %v260 = vpop.trf.xlu0
        %v261 = vpop.trf.xlu0
        %v263 = vcombine.high %v194, %v194
        %vm264 = vcmask 23552
        %v266 = vsel %vm264, %v214, 0
        %v269 = vsel %vm264, %v215, 0
        %v272 = vsel %vm264, %v216, 0
        %v275 = vsel %vm264, %v217, 0
        %v278 = vsel %vm264, %v218, 0
        %v281 = vsel %vm264, %v219, 0
        %v284 = vsel %vm264, %v220, 0
        %v287 = vsel %vm264, %v221, 0
        %v290 = vsel %vm264, %v222, 0
        %v293 = vsel %vm264, %v223, 0
        %v296 = vsel %vm264, %v224, 0
        %v299 = vsel %vm264, %v225, 0
        %v302 = vsel %vm264, %v226, 0
        %v305 = vsel %vm264, %v227, 0
        %v308 = vsel %vm264, %v228, 0
        %v311 = vsel %vm264, %v229, 0
        %v314 = vsel %vm264, %v246, 0
        %v317 = vsel %vm264, %v247, 0
        %v320 = vsel %vm264, %v248, 0
        %v323 = vsel %vm264, %v249, 0
        %v326 = vsel %vm264, %v250, 0
        %v329 = vsel %vm264, %v251, 0
        %v332 = vsel %vm264, %v252, 0
        %v335 = vsel %vm264, %v253, 0
        %v338 = vsel %vm264, %v254, 0
        %v341 = vsel %vm264, %v255, 0
        %v344 = vsel %vm264, %v256, 0
        %v347 = vsel %vm264, %v257, 0
        %v350 = vsel %vm264, %v258, 0
        %v353 = vsel %vm264, %v259, 0
        %v356 = vsel %vm264, %v260, 0
        %v359 = vsel %vm264, %v261, 0
        %vm361 = vcmask 1042432
        %v362 = vsel %vm361, %v194, 0
        %v364 = vsel %vm361, %v263, 0
        %366 = vmatprep.subr.mxu0 %v364
        %367 = vmatpush1.msra.mxu0 %v362
        %368 = vmatprep.subr.mxu0 0.0
        %369 = vmatpush1.msra.mxu0 0.0
        %370 = vmatprep.subr.mxu0 0.0
        %371 = vmatpush1.msra.mxu0 0.0
        %372 = vmatprep.subr.mxu0 0.0
        %373 = vmatpush1.msra.mxu0 0.0
        %374 = vmatprep.subr.mxu0 0.0
        %375 = vmatpush1.msra.mxu0 0.0
        %376 = vmatprep.subr.mxu0 0.0
        %377 = vmatpush1.msra.mxu0 0.0
        %378 = vmatprep.subr.mxu0 0.0
        %379 = vmatpush1.msra.mxu0 0.0
        %380 = vmatprep.subr.mxu0 0.0
        %381 = vmatpush1.msra.mxu0 0.0
        %382 = vmatprep.subr.mxu0 0.0
        %383 = vmatpush1.msra.mxu0 0.0
        %384 = vmatprep.subr.mxu0 0.0
        %385 = vmatpush1.msra.mxu0 0.0
        %386 = vmatprep.subr.mxu0 0.0
        %387 = vmatpush1.msra.mxu0 0.0
        %388 = vmatprep.subr.mxu0 0.0
        %389 = vmatpush1.msra.mxu0 0.0
        %390 = vmatprep.subr.mxu0 0.0
        %391 = vmatpush1.msra.mxu0 0.0
        %392 = vmatprep.subr.mxu0 0.0
        %393 = vmatpush1.msra.mxu0 0.0
        %394 = vmatprep.subr.mxu0 0.0
        %395 = vmatpush1.msra.mxu0 0.0
        %396 = vmatprep.subr.mxu0 0.0
        %397 = vmatpush1.msra.mxu0 0.0
        %398 = vmatprep.subr.mxu0 0.0
        %399 = vmatpush1.msra.mxu0 0.0
        %400 = vmatprep.subr.mxu0 0.0
        %401 = vmatpush1.msra.mxu0 0.0
        %402 = vmatprep.subr.mxu0 0.0
        %403 = vmatpush1.msra.mxu0 0.0
        %404 = vmatprep.subr.mxu0 0.0
        %405 = vmatpush1.msra.mxu0 0.0
        %406 = vmatprep.subr.mxu0 0.0
        %407 = vmatpush1.msra.mxu0 0.0
        %408 = vmatprep.subr.mxu0 0.0
        %409 = vmatpush1.msra.mxu0 0.0
        %410 = vmatprep.subr.mxu0 0.0
        %411 = vmatpush1.msra.mxu0 0.0
        %412 = vmatprep.subr.mxu0 0.0
        %413 = vmatpush1.msra.mxu0 0.0
        %414 = vmatprep.subr.mxu0 0.0
        %415 = vmatpush1.msra.mxu0 0.0
        %416 = vmatprep.subr.mxu0 0.0
        %417 = vmatpush1.msra.mxu0 0.0
        %418 = vmatprep.subr.mxu0 0.0
        %419 = vmatpush1.msra.mxu0 0.0
        %420 = vmatprep.subr.mxu0 0.0
        %421 = vmatpush1.msra.mxu0 0.0
        %422 = vmatprep.subr.mxu0 0.0
        %423 = vmatpush1.msra.mxu0 0.0
        %424 = vmatprep.subr.mxu0 0.0
        %425 = vmatpush1.msra.mxu0 0.0
        %426 = vmatprep.subr.mxu0 0.0
        %427 = vmatpush1.msra.mxu0 0.0
        %428 = vmatprep.subr.mxu0 0.0
        %429 = vmatpush1.msra.mxu0 0.0
        %430 = vmatprep.mubr.f32.mxu0 0.0
        %431 = vmatmul.mubr.f32.gmra.mrb[0].mxu0 %v266
        %v432 = vpop.f32.mrb[0].mxu0
        %v433 = vadd.f32 0.0, %v432
        %v434 = vpop.f32.mrb[0].mxu0
        %v435 = vadd.f32 0.0, %v434
        %436 = vmatprep.mubr.f32.mxu0 0.0
        %437 = vmatmul.mubr.f32.gmra.mrb[0].mxu0 %v269
        %v438 = vpop.f32.mrb[0].mxu0
        %v439 = vadd.f32 0.0, %v438
        %v440 = vpop.f32.mrb[0].mxu0
        %v441 = vadd.f32 0.0, %v440
        %442 = vmatprep.mubr.f32.mxu0 0.0
        %443 = vmatmul.mubr.f32.gmra.mrb[0].mxu0 %v272
        %v444 = vpop.f32.mrb[0].mxu0
        %v445 = vadd.f32 0.0, %v444
        %v446 = vpop.f32.mrb[0].mxu0
        %v447 = vadd.f32 0.0, %v446
        %448 = vmatprep.mubr.f32.mxu0 0.0
        %449 = vmatmul.mubr.f32.gmra.mrb[0].mxu0 %v275
        %v450 = vpop.f32.mrb[0].mxu0
        %v451 = vadd.f32 0.0, %v450
        %v452 = vpop.f32.mrb[0].mxu0
        %v453 = vadd.f32 0.0, %v452
        %454 = vmatprep.mubr.f32.mxu0 0.0
        %455 = vmatmul.mubr.f32.gmra.mrb[0].mxu0 %v278
        %v456 = vpop.f32.mrb[0].mxu0
        %v457 = vadd.f32 0.0, %v456
        %v458 = vpop.f32.mrb[0].mxu0
        %v459 = vadd.f32 0.0, %v458
        %460 = vmatprep.mubr.f32.mxu0 0.0
        %461 = vmatmul.mubr.f32.gmra.mrb[0].mxu0 %v281
        %v462 = vpop.f32.mrb[0].mxu0
        %v463 = vadd.f32 0.0, %v462
        %v464 = vpop.f32.mrb[0].mxu0
        %v465 = vadd.f32 0.0, %v464
        %466 = vmatprep.mubr.f32.mxu0 0.0
        %467 = vmatmul.mubr.f32.gmra.mrb[0].mxu0 %v284
        %v468 = vpop.f32.mrb[0].mxu0
        %v469 = vadd.f32 0.0, %v468
        %v470 = vpop.f32.mrb[0].mxu0
        %v471 = vadd.f32 0.0, %v470
        %472 = vmatprep.mubr.f32.mxu0 0.0
        %473 = vmatmul.mubr.f32.gmra.mrb[0].mxu0 %v287
        %v474 = vpop.f32.mrb[0].mxu0
        %v475 = vadd.f32 0.0, %v474
        %v476 = vpop.f32.mrb[0].mxu0
        %v477 = vadd.f32 0.0, %v476
        %478 = vmatprep.mubr.f32.mxu0 0.0
        %479 = vmatmul.mubr.f32.gmra.mrb[0].mxu0 %v290
        %v480 = vpop.f32.mrb[0].mxu0
        %v481 = vadd.f32 0.0, %v480
        %v482 = vpop.f32.mrb[0].mxu0
        %v483 = vadd.f32 0.0, %v482
        %484 = vmatprep.mubr.f32.mxu0 0.0
        %485 = vmatmul.mubr.f32.gmra.mrb[0].mxu0 %v293
        %v486 = vpop.f32.mrb[0].mxu0
        %v487 = vadd.f32 0.0, %v486
        %v488 = vpop.f32.mrb[0].mxu0
        %v489 = vadd.f32 0.0, %v488
        %490 = vmatprep.mubr.f32.mxu0 0.0
        %491 = vmatmul.mubr.f32.gmra.mrb[0].mxu0 %v296
        %v492 = vpop.f32.mrb[0].mxu0
        %v493 = vadd.f32 0.0, %v492
        %v494 = vpop.f32.mrb[0].mxu0
        %v495 = vadd.f32 0.0, %v494
        %496 = vmatprep.mubr.f32.mxu0 0.0
        %497 = vmatmul.mubr.f32.gmra.mrb[0].mxu0 %v299
        %v498 = vpop.f32.mrb[0].mxu0
        %v499 = vadd.f32 0.0, %v498
        %v500 = vpop.f32.mrb[0].mxu0
        %v501 = vadd.f32 0.0, %v500
        %502 = vmatprep.mubr.f32.mxu0 0.0
        %503 = vmatmul.mubr.f32.gmra.mrb[0].mxu0 %v302
        %v504 = vpop.f32.mrb[0].mxu0
        %v505 = vadd.f32 0.0, %v504
        %v506 = vpop.f32.mrb[0].mxu0
        %v507 = vadd.f32 0.0, %v506
        %508 = vmatprep.mubr.f32.mxu0 0.0
        %509 = vmatmul.mubr.f32.gmra.mrb[0].mxu0 %v305
        %v510 = vpop.f32.mrb[0].mxu0
        %v511 = vadd.f32 0.0, %v510
        %v512 = vpop.f32.mrb[0].mxu0
        %v513 = vadd.f32 0.0, %v512
        %514 = vmatprep.mubr.f32.mxu0 0.0
        %515 = vmatmul.mubr.f32.gmra.mrb[0].mxu0 %v308
        %v516 = vpop.f32.mrb[0].mxu0
        %v517 = vadd.f32 0.0, %v516
        %v518 = vpop.f32.mrb[0].mxu0
        %v519 = vadd.f32 0.0, %v518
        %520 = vmatprep.mubr.f32.mxu0 0.0
        %521 = vmatmul.mubr.f32.gmra.mrb[0].mxu0 %v311
        %v522 = vpop.f32.mrb[0].mxu0
        %v523 = vadd.f32 0.0, %v522
        %v524 = vpop.f32.mrb[0].mxu0
        %v525 = vadd.f32 0.0, %v524
        %526 = vmatprep.mubr.f32.mxu0 0.0
        %527 = vmatmul.mubr.f32.gmra.mrb[0].mxu0 %v314
        %v528 = vpop.f32.mrb[0].mxu0
        %v529 = vadd.f32 0.0, %v528
        %v530 = vpop.f32.mrb[0].mxu0
        %v531 = vadd.f32 0.0, %v530
        %532 = vmatprep.mubr.f32.mxu0 0.0
        %533 = vmatmul.mubr.f32.gmra.mrb[0].mxu0 %v317
        %v534 = vpop.f32.mrb[0].mxu0
        %v535 = vadd.f32 0.0, %v534
        %v536 = vpop.f32.mrb[0].mxu0
        %v537 = vadd.f32 0.0, %v536
        %538 = vmatprep.mubr.f32.mxu0 0.0
        %539 = vmatmul.mubr.f32.gmra.mrb[0].mxu0 %v320
        %v540 = vpop.f32.mrb[0].mxu0
        %v541 = vadd.f32 0.0, %v540
        %v542 = vpop.f32.mrb[0].mxu0
        %v543 = vadd.f32 0.0, %v542
        %544 = vmatprep.mubr.f32.mxu0 0.0
        %545 = vmatmul.mubr.f32.gmra.mrb[0].mxu0 %v323
        %v546 = vpop.f32.mrb[0].mxu0
        %v547 = vadd.f32 0.0, %v546
        %v548 = vpop.f32.mrb[0].mxu0
        %v549 = vadd.f32 0.0, %v548
        %550 = vmatprep.mubr.f32.mxu0 0.0
        %551 = vmatmul.mubr.f32.gmra.mrb[0].mxu0 %v326
        %v552 = vpop.f32.mrb[0].mxu0
        %v553 = vadd.f32 0.0, %v552
        %v554 = vpop.f32.mrb[0].mxu0
        %v555 = vadd.f32 0.0, %v554
        %556 = vmatprep.mubr.f32.mxu0 0.0
        %557 = vmatmul.mubr.f32.gmra.mrb[0].mxu0 %v329
        %v558 = vpop.f32.mrb[0].mxu0
        %v559 = vadd.f32 0.0, %v558
        %v560 = vpop.f32.mrb[0].mxu0
        %v561 = vadd.f32 0.0, %v560
        %562 = vmatprep.mubr.f32.mxu0 0.0
        %563 = vmatmul.mubr.f32.gmra.mrb[0].mxu0 %v332
        %v564 = vpop.f32.mrb[0].mxu0
        %v565 = vadd.f32 0.0, %v564
        %v566 = vpop.f32.mrb[0].mxu0
        %v567 = vadd.f32 0.0, %v566
        %568 = vmatprep.mubr.f32.mxu0 0.0
        %569 = vmatmul.mubr.f32.gmra.mrb[0].mxu0 %v335
        %v570 = vpop.f32.mrb[0].mxu0
        %v571 = vadd.f32 0.0, %v570
        %v572 = vpop.f32.mrb[0].mxu0
        %v573 = vadd.f32 0.0, %v572
        %574 = vmatprep.mubr.f32.mxu0 0.0
        %575 = vmatmul.mubr.f32.gmra.mrb[0].mxu0 %v338
        %v576 = vpop.f32.mrb[0].mxu0
        %v577 = vadd.f32 0.0, %v576
        %v578 = vpop.f32.mrb[0].mxu0
        %v579 = vadd.f32 0.0, %v578
        %580 = vmatprep.mubr.f32.mxu0 0.0
        %581 = vmatmul.mubr.f32.gmra.mrb[0].mxu0 %v341
        %v582 = vpop.f32.mrb[0].mxu0
        %v583 = vadd.f32 0.0, %v582
        %v584 = vpop.f32.mrb[0].mxu0
        %v585 = vadd.f32 0.0, %v584
        %586 = vmatprep.mubr.f32.mxu0 0.0
        %587 = vmatmul.mubr.f32.gmra.mrb[0].mxu0 %v344
        %v588 = vpop.f32.mrb[0].mxu0
        %v589 = vadd.f32 0.0, %v588
        %v590 = vpop.f32.mrb[0].mxu0
        %v591 = vadd.f32 0.0, %v590
        %592 = vmatprep.mubr.f32.mxu0 0.0
        %593 = vmatmul.mubr.f32.gmra.mrb[0].mxu0 %v347
        %v594 = vpop.f32.mrb[0].mxu0
        %v595 = vadd.f32 0.0, %v594
        %v596 = vpop.f32.mrb[0].mxu0
        %v597 = vadd.f32 0.0, %v596
        %598 = vmatprep.mubr.f32.mxu0 0.0
        %599 = vmatmul.mubr.f32.gmra.mrb[0].mxu0 %v350
        %v600 = vpop.f32.mrb[0].mxu0
        %v601 = vadd.f32 0.0, %v600
        %v602 = vpop.f32.mrb[0].mxu0
        %v603 = vadd.f32 0.0, %v602
        %604 = vmatprep.mubr.f32.mxu0 0.0
        %605 = vmatmul.mubr.f32.gmra.mrb[0].mxu0 %v353
        %v606 = vpop.f32.mrb[0].mxu0
        %v607 = vadd.f32 0.0, %v606
        %v608 = vpop.f32.mrb[0].mxu0
        %v609 = vadd.f32 0.0, %v608
        %610 = vmatprep.mubr.f32.mxu0 0.0
        %611 = vmatmul.mubr.f32.gmra.mrb[0].mxu0 %v356
        %v612 = vpop.f32.mrb[0].mxu0
        %v613 = vadd.f32 0.0, %v612
        %v614 = vpop.f32.mrb[0].mxu0
        %v615 = vadd.f32 0.0, %v614
        %616 = vmatprep.mubr.f32.mxu0 0.0
        %617 = vmatmul.mubr.f32.gmra.mrb[0].mxu0 %v359
        %v618 = vpop.f32.mrb[0].mxu0
        %v619 = vadd.f32 0.0, %v618
        %v620 = vpop.f32.mrb[0].mxu0
        %v621 = vadd.f32 0.0, %v620
        %622 = vdwg.mxu0
        %v623 = vmul.f32 %v194, %v194
        %v625 = vcombine.high %v623, %v623
        %v627 = vsel %vm361, %v623, 0.0
        %v628 = vrot.slane %v627, 4
        %v629 = vadd.f32 %v627, %v628
        %v630 = vrot.slane %v629, 2
        %v631 = vadd.f32 %v629, %v630
        %v632 = vrot.slane %v631, 1
        %v633 = vadd.f32 %v631, %v632
        %v634 = vsel %vm361, %v625, 0.0
        %v635 = vrot.slane %v634, 4
        %v636 = vadd.f32 %v634, %v635
        %v637 = vrot.slane %v636, 2
        %v638 = vadd.f32 %v636, %v637
        %v639 = vrot.slane %v638, 1
        %v640 = vadd.f32 %v638, %v639
        %v641 = vmul.f32 %v193, %v193
        %v643 = vcombine.high %v641, %v641
        %v645 = vsel %vm361, %v641, 0.0
        %v646 = vrot.slane %v645, 4
        %v647 = vadd.f32 %v645, %v646
        %v648 = vrot.slane %v647, 2
        %v649 = vadd.f32 %v647, %v648
        %v650 = vrot.slane %v649, 1
        %v651 = vadd.f32 %v649, %v650
        %v652 = vsel %vm361, %v643, 0.0
        %v653 = vrot.slane %v652, 4
        %v654 = vadd.f32 %v652, %v653
        %v655 = vrot.slane %v654, 2
        %v656 = vadd.f32 %v654, %v655
        %v657 = vrot.slane %v656, 1
        %v658 = vadd.f32 %v656, %v657
        %v659 = vmul.f32 %v433, 2.0
        %v660 = vmul.f32 %v435, 2.0
        %v661 = vmul.f32 %v439, 2.0
        %v662 = vmul.f32 %v441, 2.0
        %v663 = vmul.f32 %v445, 2.0
        %v664 = vmul.f32 %v447, 2.0
        %v665 = vmul.f32 %v451, 2.0
        %v666 = vmul.f32 %v453, 2.0
        %v667 = vmul.f32 %v457, 2.0
        %v668 = vmul.f32 %v459, 2.0
        %v669 = vmul.f32 %v463, 2.0
        %v670 = vmul.f32 %v465, 2.0
        %v671 = vmul.f32 %v469, 2.0
        %v672 = vmul.f32 %v471, 2.0
        %v673 = vmul.f32 %v475, 2.0
        %v674 = vmul.f32 %v477, 2.0
        %v675 = vmul.f32 %v481, 2.0
        %v676 = vmul.f32 %v483, 2.0
        %v677 = vmul.f32 %v487, 2.0
        %v678 = vmul.f32 %v489, 2.0
        %v679 = vmul.f32 %v493, 2.0
        %v680 = vmul.f32 %v495, 2.0
        %v681 = vmul.f32 %v499, 2.0
        %v682 = vmul.f32 %v501, 2.0
        %v683 = vmul.f32 %v505, 2.0
        %v684 = vmul.f32 %v507, 2.0
        %v685 = vmul.f32 %v511, 2.0
        %v686 = vmul.f32 %v513, 2.0
        %v687 = vmul.f32 %v517, 2.0
        %v688 = vmul.f32 %v519, 2.0
        %v689 = vmul.f32 %v523, 2.0
        %v690 = vmul.f32 %v525, 2.0
        %v691 = vmul.f32 %v529, 2.0
        %v692 = vmul.f32 %v531, 2.0
        %v693 = vmul.f32 %v535, 2.0
        %v694 = vmul.f32 %v537, 2.0
        %v695 = vmul.f32 %v541, 2.0
        %v696 = vmul.f32 %v543, 2.0
        %v697 = vmul.f32 %v547, 2.0
        %v698 = vmul.f32 %v549, 2.0
        %v699 = vmul.f32 %v553, 2.0
        %v700 = vmul.f32 %v555, 2.0
        %v701 = vmul.f32 %v559, 2.0
        %v702 = vmul.f32 %v561, 2.0
        %v703 = vmul.f32 %v565, 2.0
        %v704 = vmul.f32 %v567, 2.0
        %v705 = vmul.f32 %v571, 2.0
        %v706 = vmul.f32 %v573, 2.0
        %v707 = vmul.f32 %v577, 2.0
        %v708 = vmul.f32 %v579, 2.0
        %v709 = vmul.f32 %v583, 2.0
        %v710 = vmul.f32 %v585, 2.0
        %v711 = vmul.f32 %v589, 2.0
        %v712 = vmul.f32 %v591, 2.0
        %v713 = vmul.f32 %v595, 2.0
        %v714 = vmul.f32 %v597, 2.0
        %v715 = vmul.f32 %v601, 2.0
        %v716 = vmul.f32 %v603, 2.0
        %v717 = vmul.f32 %v607, 2.0
        %v718 = vmul.f32 %v609, 2.0
        %v719 = vmul.f32 %v613, 2.0
        %v720 = vmul.f32 %v615, 2.0
        %v721 = vmul.f32 %v619, 2.0
        %v722 = vmul.f32 %v621, 2.0
        %v723 = vsub.f32 %v659, %v633
        %v724 = vsub.f32 %v660, %v640
        %v725 = vsub.f32 %v661, %v633
        %v726 = vsub.f32 %v662, %v640
        %v727 = vsub.f32 %v663, %v633
        %v728 = vsub.f32 %v664, %v640
        %v729 = vsub.f32 %v665, %v633
        %v730 = vsub.f32 %v666, %v640
        %v731 = vsub.f32 %v667, %v633
        %v732 = vsub.f32 %v668, %v640
        %v733 = vsub.f32 %v669, %v633
        %v734 = vsub.f32 %v670, %v640
        %v735 = vsub.f32 %v671, %v633
        %v736 = vsub.f32 %v672, %v640
        %v737 = vsub.f32 %v673, %v633
        %v738 = vsub.f32 %v674, %v640
        %v739 = vsub.f32 %v675, %v633
        %v740 = vsub.f32 %v676, %v640
        %v741 = vsub.f32 %v677, %v633
        %v742 = vsub.f32 %v678, %v640
        %v743 = vsub.f32 %v679, %v633
        %v744 = vsub.f32 %v680, %v640
        %v745 = vsub.f32 %v681, %v633
        %v746 = vsub.f32 %v682, %v640
        %v747 = vsub.f32 %v683, %v633
        %v748 = vsub.f32 %v684, %v640
        %v749 = vsub.f32 %v685, %v633
        %v750 = vsub.f32 %v686, %v640
        %v751 = vsub.f32 %v687, %v633
        %v752 = vsub.f32 %v688, %v640
        %v753 = vsub.f32 %v689, %v633
        %v754 = vsub.f32 %v690, %v640
        %v755 = vsub.f32 %v691, %v633
        %v756 = vsub.f32 %v692, %v640
        %v757 = vsub.f32 %v693, %v633
        %v758 = vsub.f32 %v694, %v640
        %v759 = vsub.f32 %v695, %v633
        %v760 = vsub.f32 %v696, %v640
        %v761 = vsub.f32 %v697, %v633
        %v762 = vsub.f32 %v698, %v640
        %v763 = vsub.f32 %v699, %v633
        %v764 = vsub.f32 %v700, %v640
        %v765 = vsub.f32 %v701, %v633
        %v766 = vsub.f32 %v702, %v640
        %v767 = vsub.f32 %v703, %v633
        %v768 = vsub.f32 %v704, %v640
        %v769 = vsub.f32 %v705, %v633
        %v770 = vsub.f32 %v706, %v640
        %v771 = vsub.f32 %v707, %v633
        %v772 = vsub.f32 %v708, %v640
        %v773 = vsub.f32 %v709, %v633
        %v774 = vsub.f32 %v710, %v640
        %v775 = vsub.f32 %v711, %v633
        %v776 = vsub.f32 %v712, %v640
        %v777 = vsub.f32 %v713, %v633
        %v778 = vsub.f32 %v714, %v640
        %v779 = vsub.f32 %v715, %v633
        %v780 = vsub.f32 %v716, %v640
        %v781 = vsub.f32 %v717, %v633
        %v782 = vsub.f32 %v718, %v640
        %v783 = vsub.f32 %v719, %v633
        %v784 = vsub.f32 %v720, %v640
        %v785 = vsub.f32 %v721, %v633
        %v786 = vsub.f32 %v722, %v640
        %787 = vxpose.xlu0.b32.start [1/16] %v651, 128
        %788 = vxpose.xlu0.b32.cont [2/16] 0.0, 128
        %789 = vxpose.xlu0.b32.cont [3/16] 0.0, 128
        %790 = vxpose.xlu0.b32.cont [4/16] 0.0, 128
        %791 = vxpose.xlu0.b32.cont [5/16] 0.0, 128
        %792 = vxpose.xlu0.b32.cont [6/16] 0.0, 128
        %793 = vxpose.xlu0.b32.cont [7/16] 0.0, 128
        %794 = vxpose.xlu0.b32.cont [8/16] 0.0, 128
        %795 = vxpose.xlu0.b32.cont [9/16] 0.0, 128
        %796 = vxpose.xlu0.b32.cont [10/16] 0.0, 128
        %797 = vxpose.xlu0.b32.cont [11/16] 0.0, 128
        %798 = vxpose.xlu0.b32.cont [12/16] 0.0, 128
        %799 = vxpose.xlu0.b32.cont [13/16] 0.0, 128
        %800 = vxpose.xlu0.b32.cont [14/16] 0.0, 128
        %801 = vxpose.xlu0.b32.cont [15/16] 0.0, 128
        %802 = vxpose.xlu0.b32.end [16/16] 0.0, 128
        %v803 = vpop.trf.xlu0
        %v804 = vpop.trf.xlu0
        %v805 = vpop.trf.xlu0
        %v806 = vpop.trf.xlu0
        %v807 = vpop.trf.xlu0
        %v808 = vpop.trf.xlu0
        %v809 = vpop.trf.xlu0
        %v810 = vpop.trf.xlu0
        %v811 = vpop.trf.xlu0
        %v812 = vpop.trf.xlu0
        %v813 = vpop.trf.xlu0
        %v814 = vpop.trf.xlu0
        %v815 = vpop.trf.xlu0
        %v816 = vpop.trf.xlu0
        %v817 = vpop.trf.xlu0
        %v818 = vpop.trf.xlu0
        %819 = vxpose.xlu0.b32.start [1/16] %v658, 128
        %820 = vxpose.xlu0.b32.cont [2/16] 0.0, 128
        %821 = vxpose.xlu0.b32.cont [3/16] 0.0, 128
        %822 = vxpose.xlu0.b32.cont [4/16] 0.0, 128
        %823 = vxpose.xlu0.b32.cont [5/16] 0.0, 128
        %824 = vxpose.xlu0.b32.cont [6/16] 0.0, 128
        %825 = vxpose.xlu0.b32.cont [7/16] 0.0, 128
        %826 = vxpose.xlu0.b32.cont [8/16] 0.0, 128
        %827 = vxpose.xlu0.b32.cont [9/16] 0.0, 128
        %828 = vxpose.xlu0.b32.cont [10/16] 0.0, 128
        %829 = vxpose.xlu0.b32.cont [11/16] 0.0, 128
        %830 = vxpose.xlu0.b32.cont [12/16] 0.0, 128
        %831 = vxpose.xlu0.b32.cont [13/16] 0.0, 128
        %832 = vxpose.xlu0.b32.cont [14/16] 0.0, 128
        %833 = vxpose.xlu0.b32.cont [15/16] 0.0, 128
        %834 = vxpose.xlu0.b32.end [16/16] 0.0, 128
        %v835 = vpop.trf.xlu0
        %v836 = vpop.trf.xlu0
        %v837 = vpop.trf.xlu0
        %v838 = vpop.trf.xlu0
        %v839 = vpop.trf.xlu0
        %v840 = vpop.trf.xlu0
        %v841 = vpop.trf.xlu0
        %v842 = vpop.trf.xlu0
        %v843 = vpop.trf.xlu0
        %v844 = vpop.trf.xlu0
        %v845 = vpop.trf.xlu0
        %v846 = vpop.trf.xlu0
        %v847 = vpop.trf.xlu0
        %v848 = vpop.trf.xlu0
        %v849 = vpop.trf.xlu0
        %v850 = vpop.trf.xlu0
        %852 = vset.pattern.permute.xlu0 0
        %853 = vperm.xlu0 %852, %v803
        %v854 = vpop.permute.xlu0 %853
        %857 = vset.pattern.permute.xlu0 0
        %858 = vperm.xlu0 %857, %v804
        %v859 = vpop.permute.xlu0 %858
        %862 = vset.pattern.permute.xlu0 0
        %863 = vperm.xlu0 %862, %v805
        %v864 = vpop.permute.xlu0 %863
        %867 = vset.pattern.permute.xlu0 0
        %868 = vperm.xlu0 %867, %v806
        %v869 = vpop.permute.xlu0 %868
        %872 = vset.pattern.permute.xlu0 0
        %873 = vperm.xlu0 %872, %v807
        %v874 = vpop.permute.xlu0 %873
        %877 = vset.pattern.permute.xlu0 0
        %878 = vperm.xlu0 %877, %v808
        %v879 = vpop.permute.xlu0 %878
        %882 = vset.pattern.permute.xlu0 0
        %883 = vperm.xlu0 %882, %v809
        %v884 = vpop.permute.xlu0 %883
        %887 = vset.pattern.permute.xlu0 0
        %888 = vperm.xlu0 %887, %v810
        %v889 = vpop.permute.xlu0 %888
        %892 = vset.pattern.permute.xlu0 0
        %893 = vperm.xlu0 %892, %v811
        %v894 = vpop.permute.xlu0 %893
        %897 = vset.pattern.permute.xlu0 0
        %898 = vperm.xlu0 %897, %v812
        %v899 = vpop.permute.xlu0 %898
        %902 = vset.pattern.permute.xlu0 0
        %903 = vperm.xlu0 %902, %v813
        %v904 = vpop.permute.xlu0 %903
        %907 = vset.pattern.permute.xlu0 0
        %908 = vperm.xlu0 %907, %v814
        %v909 = vpop.permute.xlu0 %908
        %912 = vset.pattern.permute.xlu0 0
        %913 = vperm.xlu0 %912, %v815
        %v914 = vpop.permute.xlu0 %913
        %917 = vset.pattern.permute.xlu0 0
        %918 = vperm.xlu0 %917, %v816
        %v919 = vpop.permute.xlu0 %918
        %922 = vset.pattern.permute.xlu0 0
        %923 = vperm.xlu0 %922, %v817
        %v924 = vpop.permute.xlu0 %923
        %927 = vset.pattern.permute.xlu0 0
        %928 = vperm.xlu0 %927, %v818
        %v929 = vpop.permute.xlu0 %928
        %932 = vset.pattern.permute.xlu0 0
        %933 = vperm.xlu0 %932, %v835
        %v934 = vpop.permute.xlu0 %933
        %937 = vset.pattern.permute.xlu0 0
        %938 = vperm.xlu0 %937, %v836
        %v939 = vpop.permute.xlu0 %938
        %942 = vset.pattern.permute.xlu0 0
        %943 = vperm.xlu0 %942, %v837
        %v944 = vpop.permute.xlu0 %943
        %947 = vset.pattern.permute.xlu0 0
        %948 = vperm.xlu0 %947, %v838
        %v949 = vpop.permute.xlu0 %948
        %952 = vset.pattern.permute.xlu0 0
        %953 = vperm.xlu0 %952, %v839
        %v954 = vpop.permute.xlu0 %953
        %957 = vset.pattern.permute.xlu0 0
        %958 = vperm.xlu0 %957, %v840
        %v959 = vpop.permute.xlu0 %958
        %962 = vset.pattern.permute.xlu0 0
        %963 = vperm.xlu0 %962, %v841
        %v964 = vpop.permute.xlu0 %963
        %967 = vset.pattern.permute.xlu0 0
        %968 = vperm.xlu0 %967, %v842
        %v969 = vpop.permute.xlu0 %968
        %972 = vset.pattern.permute.xlu0 0
        %973 = vperm.xlu0 %972, %v843
        %v974 = vpop.permute.xlu0 %973
        %977 = vset.pattern.permute.xlu0 0
        %978 = vperm.xlu0 %977, %v844
        %v979 = vpop.permute.xlu0 %978
        %982 = vset.pattern.permute.xlu0 0
        %983 = vperm.xlu0 %982, %v845
        %v984 = vpop.permute.xlu0 %983
        %987 = vset.pattern.permute.xlu0 0
        %988 = vperm.xlu0 %987, %v846
        %v989 = vpop.permute.xlu0 %988
        %992 = vset.pattern.permute.xlu0 0
        %993 = vperm.xlu0 %992, %v847
        %v994 = vpop.permute.xlu0 %993
        %997 = vset.pattern.permute.xlu0 0
        %998 = vperm.xlu0 %997, %v848
        %v999 = vpop.permute.xlu0 %998
        %1002 = vset.pattern.permute.xlu0 0
        %1003 = vperm.xlu0 %1002, %v849
        %v1004 = vpop.permute.xlu0 %1003
        %1007 = vset.pattern.permute.xlu0 0
        %1008 = vperm.xlu0 %1007, %v850
        %v1009 = vpop.permute.xlu0 %1008
        %v1011 = vsub.f32 %v723, %v854
        %v1012 = vsub.f32 %v724, %v854
        %v1013 = vsub.f32 %v725, %v859
        %v1014 = vsub.f32 %v726, %v859
        %v1015 = vsub.f32 %v727, %v864
        %v1016 = vsub.f32 %v728, %v864
        %v1017 = vsub.f32 %v729, %v869
        %v1018 = vsub.f32 %v730, %v869
        %v1019 = vsub.f32 %v731, %v874
        %v1020 = vsub.f32 %v732, %v874
        %v1021 = vsub.f32 %v733, %v879
        %v1022 = vsub.f32 %v734, %v879
        %v1023 = vsub.f32 %v735, %v884
        %v1024 = vsub.f32 %v736, %v884
        %v1025 = vsub.f32 %v737, %v889
        %v1026 = vsub.f32 %v738, %v889
        %v1027 = vsub.f32 %v739, %v894
        %v1028 = vsub.f32 %v740, %v894
        %v1029 = vsub.f32 %v741, %v899
        %v1030 = vsub.f32 %v742, %v899
        %v1031 = vsub.f32 %v743, %v904
        %v1032 = vsub.f32 %v744, %v904
        %v1033 = vsub.f32 %v745, %v909
        %v1034 = vsub.f32 %v746, %v909
        %v1035 = vsub.f32 %v747, %v914
        %v1036 = vsub.f32 %v748, %v914
        %v1037 = vsub.f32 %v749, %v919
        %v1038 = vsub.f32 %v750, %v919
        %v1039 = vsub.f32 %v751, %v924
        %v1040 = vsub.f32 %v752, %v924
        %v1041 = vsub.f32 %v753, %v929
        %v1042 = vsub.f32 %v754, %v929
        %v1043 = vsub.f32 %v755, %v934
        %v1044 = vsub.f32 %v756, %v934
        %v1045 = vsub.f32 %v757, %v939
        %v1046 = vsub.f32 %v758, %v939
        %v1047 = vsub.f32 %v759, %v944
        %v1048 = vsub.f32 %v760, %v944
        %v1049 = vsub.f32 %v761, %v949
        %v1050 = vsub.f32 %v762, %v949
        %v1051 = vsub.f32 %v763, %v954
        %v1052 = vsub.f32 %v764, %v954
        %v1053 = vsub.f32 %v765, %v959
        %v1054 = vsub.f32 %v766, %v959
        %v1055 = vsub.f32 %v767, %v964
        %v1056 = vsub.f32 %v768, %v964
        %v1057 = vsub.f32 %v769, %v969
        %v1058 = vsub.f32 %v770, %v969
        %v1059 = vsub.f32 %v771, %v974
        %v1060 = vsub.f32 %v772, %v974
        %v1061 = vsub.f32 %v773, %v979
        %v1062 = vsub.f32 %v774, %v979
        %v1063 = vsub.f32 %v775, %v984
        %v1064 = vsub.f32 %v776, %v984
        %v1065 = vsub.f32 %v777, %v989
        %v1066 = vsub.f32 %v778, %v989
        %v1067 = vsub.f32 %v779, %v994
        %v1068 = vsub.f32 %v780, %v994
        %v1069 = vsub.f32 %v781, %v999
        %v1070 = vsub.f32 %v782, %v999
        %v1071 = vsub.f32 %v783, %v1004
        %v1072 = vsub.f32 %v784, %v1004
        %v1073 = vsub.f32 %v785, %v1009
        %v1074 = vsub.f32 %v786, %v1009
        %1075 = vst [vmem:[%s176] sm:$0xff] %v1011
        %1076 = vst [vmem:[%s176 + $0x8] sm:$0xff] %v1012
        %1077 = vst [vmem:[%s176 + $0x10] sm:$0xff] %v1013
        %1078 = vst [vmem:[%s176 + $0x18] sm:$0xff] %v1014
        %1079 = vst [vmem:[%s176 + $0x20] sm:$0xff] %v1015
        %1080 = vst [vmem:[%s176 + $0x28] sm:$0xff] %v1016
        %1081 = vst [vmem:[%s176 + $0x30] sm:$0xff] %v1017
        %1082 = vst [vmem:[%s176 + $0x38] sm:$0xff] %v1018
        %1083 = vst [vmem:[%s176 + $0x40] sm:$0xff] %v1019
        %1084 = vst [vmem:[%s176 + $0x48] sm:$0xff] %v1020
        %1085 = vst [vmem:[%s176 + $0x50] sm:$0xff] %v1021
        %1086 = vst [vmem:[%s176 + $0x58] sm:$0xff] %v1022
        %1087 = vst [vmem:[%s176 + $0x60] sm:$0xff] %v1023
        %1088 = vst [vmem:[%s176 + $0x68] sm:$0xff] %v1024
        %1089 = vst [vmem:[%s176 + $0x70] sm:$0xff] %v1025
        %1090 = vst [vmem:[%s176 + $0x78] sm:$0xff] %v1026
        %1091 = vst [vmem:[%s176 + $0x80] sm:$0xff] %v1027
        %1092 = vst [vmem:[%s176 + $0x88] sm:$0xff] %v1028
        %1093 = vst [vmem:[%s176 + $0x90] sm:$0xff] %v1029
        %1094 = vst [vmem:[%s176 + $0x98] sm:$0xff] %v1030
        %1095 = vst [vmem:[%s176 + $0xa0] sm:$0xff] %v1031
        %1096 = vst [vmem:[%s176 + $0xa8] sm:$0xff] %v1032
        %1097 = vst [vmem:[%s176 + $0xb0] sm:$0xff] %v1033
        %1098 = vst [vmem:[%s176 + $0xb8] sm:$0xff] %v1034
        %1099 = vst [vmem:[%s176 + $0xc0] sm:$0xff] %v1035
        %1100 = vst [vmem:[%s176 + $0xc8] sm:$0xff] %v1036
        %1101 = vst [vmem:[%s176 + $0xd0] sm:$0xff] %v1037
        %1102 = vst [vmem:[%s176 + $0xd8] sm:$0xff] %v1038
        %1103 = vst [vmem:[%s176 + $0xe0] sm:$0xff] %v1039
        %1104 = vst [vmem:[%s176 + $0xe8] sm:$0xff] %v1040
        %1105 = vst [vmem:[%s176 + $0xf0] sm:$0xff] %v1041
        %1106 = vst [vmem:[%s176 + $0xf8] sm:$0xff] %v1042
        %1107 = vst [vmem:[%s176 + $0x100] sm:$0xff] %v1043
        %1108 = vst [vmem:[%s176 + $0x108] sm:$0xff] %v1044
        %1109 = vst [vmem:[%s176 + $0x110] sm:$0xff] %v1045
        %1110 = vst [vmem:[%s176 + $0x118] sm:$0xff] %v1046
        %1111 = vst [vmem:[%s176 + $0x120] sm:$0xff] %v1047
        %1112 = vst [vmem:[%s176 + $0x128] sm:$0xff] %v1048
        %1113 = vst [vmem:[%s176 + $0x130] sm:$0xff] %v1049
        %1114 = vst [vmem:[%s176 + $0x138] sm:$0xff] %v1050
        %1115 = vst [vmem:[%s176 + $0x140] sm:$0xff] %v1051
        %1116 = vst [vmem:[%s176 + $0x148] sm:$0xff] %v1052
        %1117 = vst [vmem:[%s176 + $0x150] sm:$0xff] %v1053
        %1118 = vst [vmem:[%s176 + $0x158] sm:$0xff] %v1054
        %1119 = vst [vmem:[%s176 + $0x160] sm:$0xff] %v1055
        %1120 = vst [vmem:[%s176 + $0x168] sm:$0xff] %v1056
        %1121 = vst [vmem:[%s176 + $0x170] sm:$0xff] %v1057
        %1122 = vst [vmem:[%s176 + $0x178] sm:$0xff] %v1058
        %1123 = vst [vmem:[%s176 + $0x180] sm:$0xff] %v1059
        %1124 = vst [vmem:[%s176 + $0x188] sm:$0xff] %v1060
        %1125 = vst [vmem:[%s176 + $0x190] sm:$0xff] %v1061
        %1126 = vst [vmem:[%s176 + $0x198] sm:$0xff] %v1062
        %1127 = vst [vmem:[%s176 + $0x1a0] sm:$0xff] %v1063
        %1128 = vst [vmem:[%s176 + $0x1a8] sm:$0xff] %v1064
        %1129 = vst [vmem:[%s176 + $0x1b0] sm:$0xff] %v1065
        %1130 = vst [vmem:[%s176 + $0x1b8] sm:$0xff] %v1066
        %1131 = vst [vmem:[%s176 + $0x1c0] sm:$0xff] %v1067
        %1132 = vst [vmem:[%s176 + $0x1c8] sm:$0xff] %v1068
        %1133 = vst [vmem:[%s176 + $0x1d0] sm:$0xff] %v1069
        %1134 = vst [vmem:[%s176 + $0x1d8] sm:$0xff] %v1070
        %1135 = vst [vmem:[%s176 + $0x1e0] sm:$0xff] %v1071
        %1136 = vst [vmem:[%s176 + $0x1e8] sm:$0xff] %v1072
        %1137 = vst [vmem:[%s176 + $0x1f0] sm:$0xff] %v1073
        %1138 = vst [vmem:[%s176 + $0x1f8] sm:$0xff] %v1074
        %s1139 = sand.u32 %s92, 1
        %s1140 = scalar_lea.sflag [#allocation3], %s1139
        %s1141 = sand.u32 %s92, 1
        %s1142 = smul.addr %s1141, 512
        %s1143 = scalar_lea.vmem [#allocation2], %s1142
        // Predicated region
        $region29: #{tpu_custom_call.1} parent=27 // pred_check
          %p1144 = pneg %p102
        $region30: #{tpu_custom_call.1} parent=27 // pred_check_branch
          %1146 = sbr.rel (%p1144) target = $region32
        $region31: #{tpu_custom_call.1} parent=27 // pred_region
          %s1147 = smul.u32 32, %s21
          %s1149 = ssub.s32 8192, 8192
          %1150 = vsyncadd %s1140, %s1149
          %s1151 = smul.addr %s1147, 2
          %s1152 = smul.addr %s20, 64
          %s1153 = sadd.s32 %s1151, %s1152
          %s1154 = smul.addr %s1153, 128
          %s1155 = scalar_lea.hbm %s2, %s1154
          %s1156 = sshll.u32 %s1143, 4
          %s1157 = int_to_ptr.vmem [resolvable:$true] %s1156
          %1162 = dma.vmem_to_hbm [thread:$0]  %s1157, 8192, %s1155, %s1140, 256, 256, 16
        $region32: #{tpu_custom_call.1} parent=27 // pred_fallthru
          _
      $region28: #{tpu_custom_call.1} parent=5 // pred_fallthru
        _
      %p1163 = scmp.le.s32.totalorder 2, %s11
      // Predicated region
      $region33: #{tpu_custom_call.1} parent=5 // pred_check
        %p1164 = pneg %p1163
      $region34: #{tpu_custom_call.1} parent=5 // pred_check_branch
        %1166 = sbr.rel (%p1164) target = $region36
      $region35: #{tpu_custom_call.1} parent=5 // pred_region
        %s1167 = ssub.s32 %s11, 2
        // Predicated region
        $region37: #{tpu_custom_call.1} parent=35 // pred_check
          %p1168 = pneg %p108
        $region38: #{tpu_custom_call.1} parent=35 // pred_check_branch
          %1170 = sbr.rel (%p1168) target = $region40
        $region39: #{tpu_custom_call.1} parent=35 // pred_region
          %s1171 = sand.u32 %s93, 1
          %s1172 = scalar_lea.sflag [#allocation3], %s1171
          %s1173 = sand.u32 %s93, 1
          %s1174 = smul.addr %s1173, 512
          %s1175 = scalar_lea.vmem [#allocation2], %s1174
          %1176 = dma.done %s1172, 8192
        $region40: #{tpu_custom_call.1} parent=35 // pred_fallthru
          _
      $region36: #{tpu_custom_call.1} parent=5 // pred_fallthru
        _
    $region6: #{tpu_custom_call.1} parent=1 // loop_footer
      %s15 = sadd.s32 1, %s11
    $region7: #{tpu_custom_call.1} parent=1 // loop_footer_branch
      %10 = sbr.rel target = $region3
    $region8: #{tpu_custom_call.1} parent=1 // loop_exit
      _
    %1177 = vsyncpa [#allocation3], 1
    %s1178 = scalar_lea.sflag [#allocation3], 1
    %1179 = vsyncpa %s1178, 1

</llo_original>
